<compile_context>
chip_gen: v5e
topology: v5e:2x2
jax: 0.10.0
libtpu: 0.0.40
codegen_flags: <defaults>
</compile_context>

<pallas_src>
import jax
import jax.numpy as jnp
from jax.experimental import pallas as pl
from jax.experimental.pallas import tpu as pltpu


# ---------------------------------------------------------------------------
# Pallas kernel
# ---------------------------------------------------------------------------
def _custom_hardtanh_kernel(param_ref, x_ref, o_ref):
    """o = relu(x - |p|) + |p| - relu(x + |p|)   (elementwise, VPU only)."""
    a = jnp.abs(param_ref[0, 0])          # scalar from SMEM
    x = x_ref[...]
    out = jnp.maximum(x - a, 0.0) + a - jnp.maximum(x + a, 0.0)
    o_ref[...] = out.astype(o_ref.dtype)


# ---------------------------------------------------------------------------
# Wrapper: layout plumbing (flatten -> lane-dense 2-D slab -> tile -> unflatten)
# ---------------------------------------------------------------------------
def custom_hardtanh(x, param, *, lane=512, max_tile_rows=1024):
    """Pallas implementation of CustomHardtanh.forward; works for any x shape."""
    orig_shape = x.shape
    dtype = x.dtype
    total = x.size

    # Lane-dense 2-D layout: (rows, lane) with lane a multiple of 128.
    rows = pl.cdiv(total, lane)
    # Row-tile: largest tile (<= max_tile_rows) covering the input, rounded to
    # the sublane quantum (8) so the (8, 128) block constraint always holds.
    tile_rows = min(max_tile_rows, ((rows + 7) // 8) * 8)
    rows_p = pl.cdiv(rows, tile_rows) * tile_rows
    padded = rows_p * lane

    xf = jnp.ravel(x)
    if padded != total:
        xf = jnp.pad(xf, (0, padded - total))
    x2 = xf.reshape(rows_p, lane)

    p2 = jnp.reshape(param.astype(jnp.float32), (1, 1))

    grid = (rows_p // tile_rows,)
    out2 = pl.pallas_call(
        _custom_hardtanh_kernel,
        out_shape=jax.ShapeDtypeStruct((rows_p, lane), dtype),
        grid=grid,
        in_specs=[
            pl.BlockSpec(memory_space=pltpu.MemorySpace.SMEM),     # scalar |p| source
            pl.BlockSpec((tile_rows, lane), lambda i: (i, 0)),     # x row-tile (VMEM)
        ],
        out_specs=pl.BlockSpec((tile_rows, lane), lambda i: (i, 0)),
        compiler_params=pltpu.CompilerParams(
            dimension_semantics=("parallel",),   # v7x: shard tiles across both TCs
        ),
    )(p2, x2)

    return out2.reshape(-1)[:total].reshape(orig_shape)


# ---------------------------------------------------------------------------
# Pure-JAX reference (for correctness check)
# ---------------------------------------------------------------------------
def ref_custom_hardtanh(x, param):
    a = jnp.abs(param)
    return jax.nn.relu(x - a) + a - jax.nn.relu(x + a)


if __name__ == "__main__":
    key = jax.random.PRNGKey(0)
    # Small shape consistent with an image-model activation: (B, C, H, W).
    x = 2.0 * jax.random.normal(key, (2, 4, 16, 16), jnp.float32)

    # Module default is initial_param=1; the negative value exercises abs().
    for p_val in (1.0, -0.6):
        param = jnp.float32(p_val)
        out = jax.block_until_ready(custom_hardtanh(x, param))
        ref = ref_custom_hardtanh(x, param)
        assert out.shape == x.shape, out.shape
        max_err = float(jnp.max(jnp.abs(out - ref)))
        assert jnp.allclose(out, ref, atol=1e-6, rtol=1e-6), f"max abs err = {max_err}"

    print("KERNEL_OK")
</pallas_src>

<mosaic_0001>
module attributes {stable_mosaic.version = 11 : i64} {
  func.func @_custom_hardtanh_kernel(%arg0: i32, %arg1: memref<1x1xf32, #tpu.memory_space<smem>>, %arg2: memref<8x512xf32, #tpu.memory_space<vmem>>, %arg3: memref<8x512xf32, #tpu.memory_space<vmem>>) attributes {dimension_semantics = [#tpu.dimension_semantics<parallel>], iteration_bounds = array<i64: 1>, scalar_prefetch = 0 : i64, scratch_operands = 0 : i64, tpu.core_type = #tpu.core_type<tc>, window_params = [{transform_indices = @transform_0, window_bounds = array<i64: 1, 1>}, {transform_indices = @transform_1, window_bounds = array<i64: 8, 512>}, {transform_indices = @transform_2, window_bounds = array<i64: 8, 512>}]} {
    %c0 = arith.constant 0 : index
    %c0_0 = arith.constant 0 : index
    %0 = memref.load %arg1[%c0, %c0_0] : memref<1x1xf32, #tpu.memory_space<smem>>
    %1 = math.absf %0 : f32
    %c0_1 = arith.constant 0 : index
    %c0_2 = arith.constant 0 : index
    %2 = vector.load %arg2[%c0_1, %c0_2] : memref<8x512xf32, #tpu.memory_space<vmem>>, vector<8x512xf32>
    %3 = vector.broadcast %1 : f32 to vector<8x512xf32>
    %4 = arith.subf %2, %3 : vector<8x512xf32>
    %cst = arith.constant 0.000000e+00 : f32
    %5 = vector.broadcast %cst : f32 to vector<8x512xf32>
    %6 = arith.maximumf %4, %5 : vector<8x512xf32>
    %7 = vector.broadcast %1 : f32 to vector<8x512xf32>
    %8 = arith.addf %6, %7 : vector<8x512xf32>
    %9 = vector.broadcast %1 : f32 to vector<8x512xf32>
    %10 = arith.addf %2, %9 : vector<8x512xf32>
    %cst_3 = arith.constant 0.000000e+00 : f32
    %11 = vector.broadcast %cst_3 : f32 to vector<8x512xf32>
    %12 = arith.maximumf %10, %11 : vector<8x512xf32>
    %13 = arith.subf %8, %12 : vector<8x512xf32>
    %c0_4 = arith.constant 0 : index
    %c0_5 = arith.constant 0 : index
    %14 = vector.load %arg3[%c0_4, %c0_5] : memref<8x512xf32, #tpu.memory_space<vmem>>, vector<8x512xf32>
    tpu.vector_store %arg3[%c0_4, %c0_5], %13 {strides = array<i32>} : memref<8x512xf32, #tpu.memory_space<vmem>>, vector<8x512xf32>,
    return
  }
  func.func @transform_0(%arg0: i32) -> (i32, i32) {
    %c0_i32 = arith.constant 0 : i32
    %c0_i32_0 = arith.constant 0 : i32
    %c0_i32_1 = arith.constant 0 : i32
    return %c0_i32, %c0_i32_0 : i32, i32
  }
  func.func @transform_1(%arg0: i32) -> (i32, i32) {
    %c0_i32 = arith.constant 0 : i32
    %c0_i32_0 = arith.constant 0 : i32
    return %arg0, %c0_i32 : i32, i32
  }
  func.func @transform_2(%arg0: i32) -> (i32, i32) {
    %c0_i32 = arith.constant 0 : i32
    %c0_i32_0 = arith.constant 0 : i32
    return %arg0, %c0_i32 : i32, i32
  }
}

</mosaic_0001>

<llo_original>
// kernel: tpu_custom_call.1
$region0: #{tpu_custom_call.1}
  #allocation0 [shape = 'u32[]', space=smem, size = 0x4, offset = 0x4, fixed_abs, tag = 'smem constant byte address 0x4 - core index']
  #allocation1 [shape = 'u32[72,128]{1,0:T(1,128)}', space=vmem, size = 0x9000, scoped, tag = 'internal scratch']
  #allocation2 [shape = 'f32[1,1]{1,0:T(1,128)S(6)}', space=smem, size = 0x200, scoped, tag = 'scoped memory for tpu_custom_call.1']
  %s0 = inlined_call_operand.<no memory space> [shape: f32[1,1], index: 0, kind: input, shape index: {}]
  %s1 = inlined_call_operand.hbm [shape: f32[8,512], index: 1, kind: input, shape index: {}]
  %s2 = inlined_call_operand.hbm [shape: f32[8,512], index: 2, kind: output, shape index: {}]
  %s3 = sld [smem:[#allocation0]]
  $region22: #{tpu_custom_call.1} parent=0
    _
  %s5 = ssub.s32 1, %s3
  %s6 = scalar_select 0, %s5, %s3
  %7 = sst [smem:[#allocation2]] %s0
  $region1: #{tpu_custom_call.1} parent=0
    #allocation3 [shape = 'u8[16384]{0}', space=vmem, size = 0x4000, scoped, tag = 'input window, operand 1, single buffered']
    #allocation4 [shape = 's32[1]{0}', space=sflag, size = 0x4, scoped, tag = 'scoped memory for tpu_custom_call.1']
    #allocation5 [shape = 's32[1]{0}', space=sflag, size = 0x4, scoped, tag = 'scoped memory for tpu_custom_call.1']
    #allocation6 [shape = 'u8[16384]{0}', space=vmem, size = 0x4000, scoped, tag = 'output window, operand 0, single buffered']
    %8 = vsyncpa [#allocation4], 0
    %9 = vsyncpa [#allocation5], 0
    // Predicated region
    $region2: #{tpu_custom_call.1} parent=1 // pred_check
      _
    $region3: #{tpu_custom_call.1} parent=1 // pred_check_branch
      %11 = sbr.rel (0) target = $region5
    $region4: #{tpu_custom_call.1} parent=1 // pred_region
      _
    $region5: #{tpu_custom_call.1} parent=1 // pred_fallthru
      _
    // Predicated region
    $region6: #{tpu_custom_call.1} parent=1 // pred_check
      _
    $region7: #{tpu_custom_call.1} parent=1 // pred_check_branch
      %13 = sbr.rel (0) target = $region9
    $region8: #{tpu_custom_call.1} parent=1 // pred_region
      %15 = vsyncadd [#allocation4], 0
      %s17 = sshll.u32 %s1, 4
      %s18 = int_to_ptr.hbm [resolvable:$true] %s17
      %s19 = sshll.u32 [#allocation3], 4
      %s20 = int_to_ptr.vmem [resolvable:$true] %s19
      %22 = dma.hbm_to_vmem [thread:$0]  %s18, 512, %s20, [#allocation4]
    $region9: #{tpu_custom_call.1} parent=1 // pred_fallthru
      _
    // Predicated region
    $region10: #{tpu_custom_call.1} parent=1 // pred_check
      _
    $region11: #{tpu_custom_call.1} parent=1 // pred_check_branch
      %24 = sbr.rel (0) target = $region13
    $region12: #{tpu_custom_call.1} parent=1 // pred_region
      %26 = dma.done [#allocation4], 512
    $region13: #{tpu_custom_call.1} parent=1 // pred_fallthru
      _
    %s27 = sld [smem:[#allocation2]]
    %s28 = sand.u32 2147483647, %s27
    %v29 = vld [vmem:[#allocation3] sm:$0xff]
    %v30 = vld [vmem:[#allocation3 + $0x8] sm:$0xff]
    %v31 = vld [vmem:[#allocation3 + $0x10] sm:$0xff]
    %v32 = vld [vmem:[#allocation3 + $0x18] sm:$0xff]
    %v33 = vstv %s28
    %v34 = vsub.f32 %v29, %v33
    %v35 = vsub.f32 %v30, %v33
    %v36 = vsub.f32 %v31, %v33
    %v37 = vsub.f32 %v32, %v33
    %v38 = vmax.f32 %v34, 0.0
    %v39 = vmax.f32 %v35, 0.0
    %v40 = vmax.f32 %v36, 0.0
    %v41 = vmax.f32 %v37, 0.0
    %v42 = vadd.f32 %v38, %v33
    %v43 = vadd.f32 %v39, %v33
    %v44 = vadd.f32 %v40, %v33
    %v45 = vadd.f32 %v41, %v33
    %v46 = vadd.f32 %v29, %v33
    %v47 = vadd.f32 %v30, %v33
    %v48 = vadd.f32 %v31, %v33
    %v49 = vadd.f32 %v32, %v33
    %v50 = vmax.f32 %v46, 0.0
    %v51 = vmax.f32 %v47, 0.0
    %v52 = vmax.f32 %v48, 0.0
    %v53 = vmax.f32 %v49, 0.0
    %v54 = vsub.f32 %v42, %v50
    %v55 = vsub.f32 %v43, %v51
    %v56 = vsub.f32 %v44, %v52
    %v57 = vsub.f32 %v45, %v53
    %58 = vst [vmem:[#allocation6] sm:$0xff] %v54
    %59 = vst [vmem:[#allocation6 + $0x8] sm:$0xff] %v55
    %60 = vst [vmem:[#allocation6 + $0x10] sm:$0xff] %v56
    %61 = vst [vmem:[#allocation6 + $0x18] sm:$0xff] %v57
    // Predicated region
    $region14: #{tpu_custom_call.1} parent=1 // pred_check
      _
    $region15: #{tpu_custom_call.1} parent=1 // pred_check_branch
      %63 = sbr.rel (0) target = $region17
    $region16: #{tpu_custom_call.1} parent=1 // pred_region
      %65 = vsyncadd [#allocation5], 0
      %s67 = sshll.u32 [#allocation6], 4
      %s68 = int_to_ptr.vmem [resolvable:$true] %s67
      %s69 = sshll.u32 %s2, 4
      %s70 = int_to_ptr.hbm [resolvable:$true] %s69
      %72 = dma.vmem_to_hbm [thread:$0]  %s68, 512, %s70, [#allocation5]
    $region17: #{tpu_custom_call.1} parent=1 // pred_fallthru
      _
    // Predicated region
    $region18: #{tpu_custom_call.1} parent=1 // pred_check
      _
    $region19: #{tpu_custom_call.1} parent=1 // pred_check_branch
      %74 = sbr.rel (0) target = $region21
    $region20: #{tpu_custom_call.1} parent=1 // pred_region
      %76 = dma.done [#allocation5], 512
    $region21: #{tpu_custom_call.1} parent=1 // pred_fallthru
      _
    %77 = vsyncpa [#allocation4], 1
    %78 = vsyncpa [#allocation5], 1

</llo_original>
